<compile_context>
chip_gen: v5e
topology: v5e:2x2
jax: 0.10.0
libtpu: 0.0.40
codegen_flags: <defaults>
</compile_context>

<pallas_src>
import jax
import jax.numpy as jnp
from jax import lax
from jax.experimental import pallas as pl
from jax.experimental.pallas import tpu as pltpu


def _round_up(n, m):
    return ((n + m - 1) // m) * m


def _deeper_ncf_kernel(x_ref, utab_ref, itab_ref, au_ref, ai_ref, bias_ref,
                       w2_ref, w3_ref, w4_ref, w5_ref, out_ref):
    f32, bf16 = jnp.float32, jnp.bfloat16
    x = x_ref[...]                                    # (TB, 2) int32
    tb = x.shape[0]
    nu, k = utab_ref.shape
    ni = itab_ref.shape[0]
    sw = out_ref.shape[1]

    # ---- in-kernel embedding gather via one-hot matmul (MXU) --------------
    # Assumes 0 <= idx < table size (out-of-range rows would give zeros, not
    # an error, unlike a real gather).
    # TODO(synk): for embedding tables too large for VMEM residency, switch to
    # PrefetchScalarGridSpec + pl.Element(1) row gather or a manual DMA gather
    # with the tables left in HBM (memory_space=pl.ANY).
    u_idx = x[:, 0:1]                                 # (TB, 1)
    i_idx = x[:, 1:2]
    u_oh = (lax.broadcasted_iota(jnp.int32, (tb, nu), 1) == u_idx).astype(f32)
    i_oh = (lax.broadcasted_iota(jnp.int32, (tb, ni), 1) == i_idx).astype(f32)
    # f32 gather path: returned embeddings stay as close to the tables as the
    # MXU f32 pass allows (exact when table values are bf16-representable).
    u_emb = jnp.dot(u_oh, utab_ref[...], preferred_element_type=f32)   # (TB, K)
    i_emb = jnp.dot(i_oh, itab_ref[...], preferred_element_type=f32)   # (TB, K)

    # ---- layer 1 folded into the gather (bf16 MXU, f32 accumulate) --------
    b = bias_ref[...]                                 # (4, K) f32
    u_oh_b = u_oh.astype(bf16)                        # exact 0/1 cast
    i_oh_b = i_oh.astype(bf16)
    h = (jnp.dot(u_oh_b, au_ref[...], preferred_element_type=f32) +
         jnp.dot(i_oh_b, ai_ref[...], preferred_element_type=f32))
    h = jnp.maximum(h + b[0:1, :k], 0.0)              # (TB, K)   f32 VPU math

    # ---- layers 2-4 + final no-bias layer: bf16 inputs, f32 accumulation --
    h = jnp.maximum(jnp.dot(h.astype(bf16), w2_ref[...],
                            preferred_element_type=f32) + b[1:2, :k // 2], 0.0)
    h = jnp.maximum(jnp.dot(h.astype(bf16), w3_ref[...],
                            preferred_element_type=f32) + b[2:3, :k // 4], 0.0)
    h = jnp.maximum(jnp.dot(h.astype(bf16), w4_ref[...],
                            preferred_element_type=f32) + b[3:4, :k // 8], 0.0)
    logit = jnp.dot(h.astype(bf16), w5_ref[...],
                    preferred_element_type=f32)        # (TB, 1)

    # ---- lane-dense output slab: [logit | user_embed | item_embed | 0] ----
    # Assembled in registers (VPU/XLU lane shifts, no MXU) and written with a
    # single unmasked lane-dense store; HBM writeback is one (TB, SW) block.
    pad = jnp.zeros((tb, sw - 1 - 2 * k), f32)
    out_ref[...] = jnp.concatenate([logit, u_emb, i_emb, pad], axis=-1)


def deeper_ncf_forward(x, params, *, tb=512):
    """x: (B, 2) int32 [user_idx, item_idx]. Returns (out, user_embed, item_embed)."""
    B = x.shape[0]
    num_users, K = params["user_embedding"].shape
    num_items = params["item_embedding"].shape[0]
    assert K % 8 == 0, "embedding_k must be divisible by 8 (linear4 output dim)"

    # Lane-dense output slab width: [logit | user_embed | item_embed | pad].
    SW = _round_up(1 + 2 * K, 128)

    # Batch tile: multiple of 8 sublanes.  Prefer >= 2 grid steps when the
    # batch allows it so the "parallel" batch axis can shard across the two
    # TensorCores on v7x (single grid step leaves one core idle).
    TB = min(tb, _round_up(B, 8))
    if B >= 16 and _round_up(B, TB) // TB < 2:
        TB = _round_up(pl.cdiv(B, 2), 8)
    Bp = _round_up(B, TB)
    x_p = jnp.pad(x, ((0, Bp - B), (0, 0))) if Bp != B else x  # pad rows use idx 0

    f32, bf16 = jnp.float32, jnp.bfloat16
    utab = params["user_embedding"].astype(f32)
    itab = params["item_embedding"].astype(f32)
    # nn.Linear stores weight as (out, in); kernel wants (in, out).
    w1t = params["w1"].T.astype(f32)                 # (2K, K)
    # Fold layer 1 into the gather (precompute at high precision, store bf16).
    au = jnp.dot(utab, w1t[:K], precision=jax.lax.Precision.HIGHEST).astype(bf16)
    ai = jnp.dot(itab, w1t[K:], precision=jax.lax.Precision.HIGHEST).astype(bf16)
    w2 = params["w2"].T.astype(bf16)                 # (K, K/2)
    w3 = params["w3"].T.astype(bf16)                 # (K/2, K/4)
    w4 = params["w4"].T.astype(bf16)                 # (K/4, K/8)
    w5 = params["w5"].T.astype(bf16)                 # (K/8, 1)  (no bias)
    # Consolidated bias slab: row j holds bias of layer j+1, zero-padded to K.
    bias = jnp.zeros((4, K), f32)
    bias = bias.at[0, :K].set(params["b1"].astype(f32))
    bias = bias.at[1, :K // 2].set(params["b2"].astype(f32))
    bias = bias.at[2, :K // 4].set(params["b3"].astype(f32))
    bias = bias.at[3, :K // 8].set(params["b4"].astype(f32))

    # Explicit VMEM budget (v7x: 64 MiB physical / 32 MiB default scoped).
    const_arrays = (utab, itab, au, ai, bias, w2, w3, w4, w5)
    resident = sum(a.size * a.dtype.itemsize for a in const_arrays)
    tile_io = TB * 2 * 4 + TB * SW * 4               # x tile + out tile
    onehot_live = TB * (num_users + num_items) * 6   # f32 + bf16 one-hots
    est = 2 * resident + 2 * tile_io + onehot_live + (8 << 20)
    vmem_limit = int(min(max(est, 32 << 20), 100 << 20))

    row_map = lambda b: (b, 0)       # batch-tiled operands
    const_map = lambda b: (0, 0)     # VMEM-resident weights / tables
    full = lambda a: pl.BlockSpec(a.shape, const_map)

    out_slab = pl.pallas_call(
        _deeper_ncf_kernel,
        out_shape=jax.ShapeDtypeStruct((Bp, SW), f32),
        grid=(Bp // TB,),
        in_specs=[
            pl.BlockSpec((TB, 2), row_map),
            full(utab), full(itab),
            full(au), full(ai),
            full(bias),
            full(w2), full(w3), full(w4), full(w5),
        ],
        out_specs=pl.BlockSpec((TB, SW), row_map),
        compiler_params=pltpu.CompilerParams(
            dimension_semantics=("parallel",),
            vmem_limit_bytes=vmem_limit,
        ),
    )(x_p, utab, itab, au, ai, bias, w2, w3, w4, w5)

    out = out_slab[:B, 0:1]
    user_embed = out_slab[:B, 1:1 + K]
    item_embed = out_slab[:B, 1 + K:1 + 2 * K]
    return out, user_embed, item_embed


def _reference_forward(x, params):
    """Pure-JAX f32 reference mirroring the PyTorch DeeperNCF module."""
    u = params["user_embedding"][x[:, 0]]
    i = params["item_embedding"][x[:, 1]]
    z = jnp.concatenate([u, i], axis=1)
    h = jax.nn.relu(z @ params["w1"].T + params["b1"])
    h = jax.nn.relu(h @ params["w2"].T + params["b2"])
    h = jax.nn.relu(h @ params["w3"].T + params["b3"])
    h = jax.nn.relu(h @ params["w4"].T + params["b4"])
    out = h @ params["w5"].T
    return out, u, i


def init_params(key, num_users, num_items, embedding_k):
    k = embedding_k
    # (out, in) shapes, matching torch nn.Linear storage.
    dims = [(k, 2 * k), (k // 2, k), (k // 4, k // 2), (k // 8, k // 4), (1, k // 8)]
    ks = jax.random.split(key, 2 + 2 * len(dims))
    params = {
        "user_embedding": jax.random.normal(ks[0], (num_users, k), jnp.float32),
        "item_embedding": jax.random.normal(ks[1], (num_items, k), jnp.float32),
    }
    for n, (out_d, in_d) in enumerate(dims, start=1):
        s = 1.0 / jnp.sqrt(jnp.float32(in_d))
        params[f"w{n}"] = jax.random.uniform(ks[2 * n], (out_d, in_d), jnp.float32, -s, s)
        if n < 5:  # linear_last has no bias
            params[f"b{n}"] = jax.random.uniform(ks[2 * n + 1], (out_d,), jnp.float32, -s, s)
    return params


if __name__ == "__main__":
    num_users, num_items, embedding_k = 32, 48, 32
    batch = 8

    key = jax.random.PRNGKey(0)
    pkey, ukey, ikey, tkey = jax.random.split(key, 4)
    params = init_params(pkey, num_users, num_items, embedding_k)

    user_idx = jax.random.randint(ukey, (batch,), 0, num_users, dtype=jnp.int32)
    item_idx = jax.random.randint(ikey, (batch,), 0, num_items, dtype=jnp.int32)
    x = jnp.stack([user_idx, item_idx], axis=1)      # (B, 2) int32

    # --- float test (bf16 matmul inputs, f32 accumulate) --------------------
    out, user_embed, item_embed = deeper_ncf_forward(x, params)
    jax.block_until_ready((out, user_embed, item_embed))
    out_r, u_r, i_r = _reference_forward(x, params)
    assert out.shape == (batch, 1)
    assert user_embed.shape == (batch, embedding_k)
    assert item_embed.shape == (batch, embedding_k)
    assert jnp.allclose(out, out_r, atol=2e-2, rtol=2e-2)
    assert jnp.allclose(user_embed, u_r, atol=1e-2, rtol=1e-2)
    assert jnp.allclose(item_embed, i_r, atol=1e-2, rtol=1e-2)

    # --- exact integer-valued layout test (catches indexing / column-offset
    # bugs that loose float tolerances could hide): bf16-exact table values
    # make the in-kernel one-hot gather exact, so embeddings must match
    # bit-for-bit.
    params_int = dict(params)
    params_int["user_embedding"] = jax.random.randint(
        tkey, (num_users, embedding_k), -3, 4).astype(jnp.float32)
    params_int["item_embedding"] = jax.random.randint(
        jax.random.fold_in(tkey, 1), (num_items, embedding_k), -3, 4).astype(jnp.float32)
    out2, u2, i2 = deeper_ncf_forward(x, params_int)
    jax.block_until_ready((out2, u2, i2))
    out2_r, u2_r, i2_r = _reference_forward(x, params_int)
    assert jnp.array_equal(u2, u2_r), "user_embed layout/indexing mismatch"
    assert jnp.array_equal(i2, i2_r), "item_embed layout/indexing mismatch"
    assert jnp.allclose(out2, out2_r, atol=5e-2, rtol=5e-2)

    print("KERNEL_OK")
</pallas_src>

<mosaic_0001>
module attributes {stable_mosaic.version = 11 : i64} {
  func.func @_deeper_ncf_kernel(%arg0: i32, %arg1: memref<8x2xi32, #tpu.memory_space<vmem>>, %arg2: memref<32x32xf32, #tpu.memory_space<vmem>>, %arg3: memref<48x32xf32, #tpu.memory_space<vmem>>, %arg4: memref<32x32xbf16, #tpu.memory_space<vmem>>, %arg5: memref<48x32xbf16, #tpu.memory_space<vmem>>, %arg6: memref<4x32xf32, #tpu.memory_space<vmem>>, %arg7: memref<32x16xbf16, #tpu.memory_space<vmem>>, %arg8: memref<16x8xbf16, #tpu.memory_space<vmem>>, %arg9: memref<8x4xbf16, #tpu.memory_space<vmem>>, %arg10: memref<4x1xbf16, #tpu.memory_space<vmem>>, %arg11: memref<8x128xf32, #tpu.memory_space<vmem>>) attributes {dimension_semantics = [#tpu.dimension_semantics<parallel>], iteration_bounds = array<i64: 1>, scalar_prefetch = 0 : i64, scratch_operands = 0 : i64, tpu.core_type = #tpu.core_type<tc>, window_params = [{transform_indices = @transform_0, window_bounds = array<i64: 8, 2>}, {pipeline_mode = #tpu.pipeline_mode<synchronous>, transform_indices = @transform_1, window_bounds = array<i64: 32, 32>}, {pipeline_mode = #tpu.pipeline_mode<synchronous>, transform_indices = @transform_2, window_bounds = array<i64: 48, 32>}, {pipeline_mode = #tpu.pipeline_mode<synchronous>, transform_indices = @transform_3, window_bounds = array<i64: 32, 32>}, {pipeline_mode = #tpu.pipeline_mode<synchronous>, transform_indices = @transform_4, window_bounds = array<i64: 48, 32>}, {pipeline_mode = #tpu.pipeline_mode<synchronous>, transform_indices = @transform_5, window_bounds = array<i64: 4, 32>}, {pipeline_mode = #tpu.pipeline_mode<synchronous>, transform_indices = @transform_6, window_bounds = array<i64: 32, 16>}, {pipeline_mode = #tpu.pipeline_mode<synchronous>, transform_indices = @transform_7, window_bounds = array<i64: 16, 8>}, {pipeline_mode = #tpu.pipeline_mode<synchronous>, transform_indices = @transform_8, window_bounds = array<i64: 8, 4>}, {pipeline_mode = #tpu.pipeline_mode<synchronous>, transform_indices = @transform_9, window_bounds = array<i64: 4, 1>}, {transform_indices = @transform_10, window_bounds = array<i64: 8, 128>}]} {
    %c0 = arith.constant 0 : index
    %c0_0 = arith.constant 0 : index
    %0 = vector.load %arg1[%c0, %c0_0] : memref<8x2xi32, #tpu.memory_space<vmem>>, vector<8x2xi32>
    %1 = vector.extract_strided_slice %0 {offsets = [0, 0], sizes = [8, 1], strides = [1, 1]} : vector<8x2xi32> to vector<8x1xi32>
    %2 = vector.extract_strided_slice %0 {offsets = [0, 1], sizes = [8, 1], strides = [1, 1]} : vector<8x2xi32> to vector<8x1xi32>
    %3 = tpu.iota {dimensions = array<i32: 1>} : vector<8x32xi32>
    %4 = vector.broadcast %1 : vector<8x1xi32> to vector<8x32xi32>
    %5 = arith.cmpi eq, %3, %4 : vector<8x32xi32>
    %6 = arith.extui %5 : vector<8x32xi1> to vector<8x32xi32>
    %7 = arith.sitofp %6 : vector<8x32xi32> to vector<8x32xf32>
    %8 = tpu.iota {dimensions = array<i32: 1>} : vector<8x48xi32>
    %9 = vector.broadcast %2 : vector<8x1xi32> to vector<8x48xi32>
    %10 = arith.cmpi eq, %8, %9 : vector<8x48xi32>
    %11 = arith.extui %10 : vector<8x48xi1> to vector<8x48xi32>
    %12 = arith.sitofp %11 : vector<8x48xi32> to vector<8x48xf32>
    %c0_1 = arith.constant 0 : index
    %c0_2 = arith.constant 0 : index
    %13 = vector.load %arg2[%c0_1, %c0_2] : memref<32x32xf32, #tpu.memory_space<vmem>>, vector<32x32xf32>
    %cst = arith.constant dense<0.000000e+00> : vector<8x32xf32>
    %14 = tpu.matmul %7, %13, %cst {dimension_numbers = #tpu.dot_dimension_numbers<[1], [0], [0], [1], [0, 0, 1, 1], [], []>} : vector<8x32xf32>, vector<32x32xf32>, vector<8x32xf32> -> vector<8x32xf32>
    %c0_3 = arith.constant 0 : index
    %c0_4 = arith.constant 0 : index
    %15 = vector.load %arg3[%c0_3, %c0_4] : memref<48x32xf32, #tpu.memory_space<vmem>>, vector<48x32xf32>
    %cst_5 = arith.constant dense<0.000000e+00> : vector<8x32xf32>
    %16 = tpu.matmul %12, %15, %cst_5 {dimension_numbers = #tpu.dot_dimension_numbers<[1], [0], [0], [1], [0, 0, 1, 1], [], []>} : vector<8x48xf32>, vector<48x32xf32>, vector<8x32xf32> -> vector<8x32xf32>
    %c0_6 = arith.constant 0 : index
    %c0_7 = arith.constant 0 : index
    %17 = vector.load %arg6[%c0_6, %c0_7] : memref<4x32xf32, #tpu.memory_space<vmem>>, vector<4x32xf32>
    %18 = arith.truncf %7 : vector<8x32xf32> to vector<8x32xbf16>
    %19 = arith.truncf %12 : vector<8x48xf32> to vector<8x48xbf16>
    %c0_8 = arith.constant 0 : index
    %c0_9 = arith.constant 0 : index
    %20 = vector.load %arg4[%c0_8, %c0_9] : memref<32x32xbf16, #tpu.memory_space<vmem>>, vector<32x32xbf16>
    %cst_10 = arith.constant dense<0.000000e+00> : vector<8x32xf32>
    %21 = tpu.matmul %18, %20, %cst_10 {dimension_numbers = #tpu.dot_dimension_numbers<[1], [0], [0], [1], [0, 0, 1, 1], [], []>} : vector<8x32xbf16>, vector<32x32xbf16>, vector<8x32xf32> -> vector<8x32xf32>
    %c0_11 = arith.constant 0 : index
    %c0_12 = arith.constant 0 : index
    %22 = vector.load %arg5[%c0_11, %c0_12] : memref<48x32xbf16, #tpu.memory_space<vmem>>, vector<48x32xbf16>
    %cst_13 = arith.constant dense<0.000000e+00> : vector<8x32xf32>
    %23 = tpu.matmul %19, %22, %cst_13 {dimension_numbers = #tpu.dot_dimension_numbers<[1], [0], [0], [1], [0, 0, 1, 1], [], []>} : vector<8x48xbf16>, vector<48x32xbf16>, vector<8x32xf32> -> vector<8x32xf32>
    %24 = arith.addf %21, %23 : vector<8x32xf32>
    %25 = vector.extract_strided_slice %17 {offsets = [0, 0], sizes = [1, 32], strides = [1, 1]} : vector<4x32xf32> to vector<1x32xf32>
    %26 = vector.broadcast %25 : vector<1x32xf32> to vector<8x32xf32>
    %27 = arith.addf %24, %26 : vector<8x32xf32>
    %cst_14 = arith.constant 0.000000e+00 : f32
    %28 = vector.broadcast %cst_14 : f32 to vector<8x32xf32>
    %29 = arith.maximumf %27, %28 : vector<8x32xf32>
    %30 = arith.truncf %29 : vector<8x32xf32> to vector<8x32xbf16>
    %c0_15 = arith.constant 0 : index
    %c0_16 = arith.constant 0 : index
    %31 = vector.load %arg7[%c0_15, %c0_16] : memref<32x16xbf16, #tpu.memory_space<vmem>>, vector<32x16xbf16>
    %cst_17 = arith.constant dense<0.000000e+00> : vector<8x16xf32>
    %32 = tpu.matmul %30, %31, %cst_17 {dimension_numbers = #tpu.dot_dimension_numbers<[1], [0], [0], [1], [0, 0, 1, 1], [], []>} : vector<8x32xbf16>, vector<32x16xbf16>, vector<8x16xf32> -> vector<8x16xf32>
    %33 = vector.extract_strided_slice %17 {offsets = [1, 0], sizes = [1, 16], strides = [1, 1]} : vector<4x32xf32> to vector<1x16xf32>
    %34 = vector.broadcast %33 : vector<1x16xf32> to vector<8x16xf32>
    %35 = arith.addf %32, %34 : vector<8x16xf32>
    %cst_18 = arith.constant 0.000000e+00 : f32
    %36 = vector.broadcast %cst_18 : f32 to vector<8x16xf32>
    %37 = arith.maximumf %35, %36 : vector<8x16xf32>
    %38 = arith.truncf %37 : vector<8x16xf32> to vector<8x16xbf16>
    %c0_19 = arith.constant 0 : index
    %c0_20 = arith.constant 0 : index
    %39 = vector.load %arg8[%c0_19, %c0_20] : memref<16x8xbf16, #tpu.memory_space<vmem>>, vector<16x8xbf16>
    %cst_21 = arith.constant dense<0.000000e+00> : vector<8x8xf32>
    %40 = tpu.matmul %38, %39, %cst_21 {dimension_numbers = #tpu.dot_dimension_numbers<[1], [0], [0], [1], [0, 0, 1, 1], [], []>} : vector<8x16xbf16>, vector<16x8xbf16>, vector<8x8xf32> -> vector<8x8xf32>
    %41 = vector.extract_strided_slice %17 {offsets = [2, 0], sizes = [1, 8], strides = [1, 1]} : vector<4x32xf32> to vector<1x8xf32>
    %42 = vector.broadcast %41 : vector<1x8xf32> to vector<8x8xf32>
    %43 = arith.addf %40, %42 : vector<8x8xf32>
    %cst_22 = arith.constant 0.000000e+00 : f32
    %44 = vector.broadcast %cst_22 : f32 to vector<8x8xf32>
    %45 = arith.maximumf %43, %44 : vector<8x8xf32>
    %46 = arith.truncf %45 : vector<8x8xf32> to vector<8x8xbf16>
    %c0_23 = arith.constant 0 : index
    %c0_24 = arith.constant 0 : index
    %47 = vector.load %arg9[%c0_23, %c0_24] : memref<8x4xbf16, #tpu.memory_space<vmem>>, vector<8x4xbf16>
    %cst_25 = arith.constant dense<0.000000e+00> : vector<8x4xf32>
    %48 = tpu.matmul %46, %47, %cst_25 {dimension_numbers = #tpu.dot_dimension_numbers<[1], [0], [0], [1], [0, 0, 1, 1], [], []>} : vector<8x8xbf16>, vector<8x4xbf16>, vector<8x4xf32> -> vector<8x4xf32>
    %49 = vector.extract_strided_slice %17 {offsets = [3, 0], sizes = [1, 4], strides = [1, 1]} : vector<4x32xf32> to vector<1x4xf32>
    %50 = vector.broadcast %49 : vector<1x4xf32> to vector<8x4xf32>
    %51 = arith.addf %48, %50 : vector<8x4xf32>
    %cst_26 = arith.constant 0.000000e+00 : f32
    %52 = vector.broadcast %cst_26 : f32 to vector<8x4xf32>
    %53 = arith.maximumf %51, %52 : vector<8x4xf32>
    %54 = arith.truncf %53 : vector<8x4xf32> to vector<8x4xbf16>
    %c0_27 = arith.constant 0 : index
    %c0_28 = arith.constant 0 : index
    %55 = vector.load %arg10[%c0_27, %c0_28] : memref<4x1xbf16, #tpu.memory_space<vmem>>, vector<4x1xbf16>
    %cst_29 = arith.constant dense<0.000000e+00> : vector<8x1xf32>
    %56 = tpu.matmul %54, %55, %cst_29 {dimension_numbers = #tpu.dot_dimension_numbers<[1], [0], [0], [1], [0, 0, 1, 1], [], []>} : vector<8x4xbf16>, vector<4x1xbf16>, vector<8x1xf32> -> vector<8x1xf32>
    %cst_30 = arith.constant 0.000000e+00 : f32
    %57 = vector.broadcast %cst_30 : f32 to vector<8x63xf32>
    %58 = tpu.concatenate %56, %14, %16, %57 in 1 : vector<8x1xf32>, vector<8x32xf32>, vector<8x32xf32>, vector<8x63xf32> -> vector<8x128xf32>
    %c0_31 = arith.constant 0 : index
    %c0_32 = arith.constant 0 : index
    %59 = vector.load %arg11[%c0_31, %c0_32] : memref<8x128xf32, #tpu.memory_space<vmem>>, vector<8x128xf32>
    tpu.vector_store %arg11[%c0_31, %c0_32], %58 {strides = array<i32>} : memref<8x128xf32, #tpu.memory_space<vmem>>, vector<8x128xf32>,
    return
  }
  func.func @transform_0(%arg0: i32) -> (i32, i32) {
    %c0_i32 = arith.constant 0 : i32
    %c0_i32_0 = arith.constant 0 : i32
    return %arg0, %c0_i32 : i32, i32
  }
  func.func @transform_1(%arg0: i32) -> (i32, i32) {
    %c0_i32 = arith.constant 0 : i32
    %c0_i32_0 = arith.constant 0 : i32
    %c0_i32_1 = arith.constant 0 : i32
    return %c0_i32, %c0_i32_0 : i32, i32
  }
  func.func @transform_2(%arg0: i32) -> (i32, i32) {
    %c0_i32 = arith.constant 0 : i32
    %c0_i32_0 = arith.constant 0 : i32
    %c0_i32_1 = arith.constant 0 : i32
    return %c0_i32, %c0_i32_0 : i32, i32
  }
  func.func @transform_3(%arg0: i32) -> (i32, i32) {
    %c0_i32 = arith.constant 0 : i32
    %c0_i32_0 = arith.constant 0 : i32
    %c0_i32_1 = arith.constant 0 : i32
    return %c0_i32, %c0_i32_0 : i32, i32
  }
  func.func @transform_4(%arg0: i32) -> (i32, i32) {
    %c0_i32 = arith.constant 0 : i32
    %c0_i32_0 = arith.constant 0 : i32
    %c0_i32_1 = arith.constant 0 : i32
    return %c0_i32, %c0_i32_0 : i32, i32
  }
  func.func @transform_5(%arg0: i32) -> (i32, i32) {
    %c0_i32 = arith.constant 0 : i32
    %c0_i32_0 = arith.constant 0 : i32
    %c0_i32_1 = arith.constant 0 : i32
    return %c0_i32, %c0_i32_0 : i32, i32
  }
  func.func @transform_6(%arg0: i32) -> (i32, i32) {
    %c0_i32 = arith.constant 0 : i32
    %c0_i32_0 = arith.constant 0 : i32
    %c0_i32_1 = arith.constant 0 : i32
    return %c0_i32, %c0_i32_0 : i32, i32
  }
  func.func @transform_7(%arg0: i32) -> (i32, i32) {
    %c0_i32 = arith.constant 0 : i32
    %c0_i32_0 = arith.constant 0 : i32
    %c0_i32_1 = arith.constant 0 : i32
    return %c0_i32, %c0_i32_0 : i32, i32
  }
  func.func @transform_8(%arg0: i32) -> (i32, i32) {
    %c0_i32 = arith.constant 0 : i32
    %c0_i32_0 = arith.constant 0 : i32
    %c0_i32_1 = arith.constant 0 : i32
    return %c0_i32, %c0_i32_0 : i32, i32
  }
  func.func @transform_9(%arg0: i32) -> (i32, i32) {
    %c0_i32 = arith.constant 0 : i32
    %c0_i32_0 = arith.constant 0 : i32
    %c0_i32_1 = arith.constant 0 : i32
    return %c0_i32, %c0_i32_0 : i32, i32
  }
  func.func @transform_10(%arg0: i32) -> (i32, i32) {
    %c0_i32 = arith.constant 0 : i32
    %c0_i32_0 = arith.constant 0 : i32
    return %arg0, %c0_i32 : i32, i32
  }
}

</mosaic_0001>

<llo_original>
// kernel: tpu_custom_call.1
$region0: #{tpu_custom_call.1}
  #allocation0 [shape = 'u32[]', space=smem, size = 0x4, offset = 0x4, fixed_abs, tag = 'smem constant byte address 0x4 - core index']
  #allocation1 [shape = 'u32[72,128]{1,0:T(1,128)}', space=vmem, size = 0x9000, scoped, tag = 'internal scratch']
  %s0 = inlined_call_operand.vmem [shape: s32[8,2], index: 0, kind: input, shape index: {}]
  %s1 = inlined_call_operand.vmem [shape: f32[32,32], index: 1, kind: input, shape index: {}]
  %s2 = inlined_call_operand.vmem [shape: f32[48,32], index: 2, kind: input, shape index: {}]
  %s3 = inlined_call_operand.vmem [shape: bf16[32,32], index: 3, kind: input, shape index: {}]
  %s4 = inlined_call_operand.vmem [shape: bf16[48,32], index: 4, kind: input, shape index: {}]
  %s5 = inlined_call_operand.vmem [shape: f32[4,32], index: 5, kind: input, shape index: {}]
  %s6 = inlined_call_operand.vmem [shape: bf16[32,16], index: 6, kind: input, shape index: {}]
  %s7 = inlined_call_operand.vmem [shape: bf16[16,8], index: 7, kind: input, shape index: {}]
  %s8 = inlined_call_operand.vmem [shape: bf16[8,4], index: 8, kind: input, shape index: {}]
  %s9 = inlined_call_operand.vmem [shape: bf16[4,1], index: 9, kind: input, shape index: {}]
  %s10 = inlined_call_operand.hbm [shape: f32[8,128], index: 10, kind: output, shape index: {}]
  %s11 = sld [smem:[#allocation0]]
  $region50: #{tpu_custom_call.1} parent=0
    _
  %s13 = ssub.s32 1, %s11
  %s14 = scalar_select 0, %s13, %s11
  $region1: #{tpu_custom_call.1} parent=0
    #allocation2 [shape = 'u8[4096]{0}', space=vmem, size = 0x1000, scoped, tag = 'output window, operand 0, single buffered']
    #allocation3 [shape = 's32[1]{0}', space=sflag, size = 0x4, scoped, tag = 'scoped memory for tpu_custom_call.1']
    %15 = vsyncpa [#allocation3], 0
    // Predicated region
    $region2: #{tpu_custom_call.1} parent=1 // pred_check
      _
    $region3: #{tpu_custom_call.1} parent=1 // pred_check_branch
      %17 = sbr.rel (0) target = $region5
    $region4: #{tpu_custom_call.1} parent=1 // pred_region
      _
    $region5: #{tpu_custom_call.1} parent=1 // pred_fallthru
      _
    // Predicated region
    $region6: #{tpu_custom_call.1} parent=1 // pred_check
      _
    $region7: #{tpu_custom_call.1} parent=1 // pred_check_branch
      %19 = sbr.rel (0) target = $region9
    $region8: #{tpu_custom_call.1} parent=1 // pred_region
      _
    $region9: #{tpu_custom_call.1} parent=1 // pred_fallthru
      _
    // Predicated region
    $region10: #{tpu_custom_call.1} parent=1 // pred_check
      _
    $region11: #{tpu_custom_call.1} parent=1 // pred_check_branch
      %21 = sbr.rel (0) target = $region13
    $region12: #{tpu_custom_call.1} parent=1 // pred_region
      _
    $region13: #{tpu_custom_call.1} parent=1 // pred_fallthru
      _
    // Predicated region
    $region14: #{tpu_custom_call.1} parent=1 // pred_check
      _
    $region15: #{tpu_custom_call.1} parent=1 // pred_check_branch
      %23 = sbr.rel (0) target = $region17
    $region16: #{tpu_custom_call.1} parent=1 // pred_region
      _
    $region17: #{tpu_custom_call.1} parent=1 // pred_fallthru
      _
    // Predicated region
    $region18: #{tpu_custom_call.1} parent=1 // pred_check
      _
    $region19: #{tpu_custom_call.1} parent=1 // pred_check_branch
      %25 = sbr.rel (0) target = $region21
    $region20: #{tpu_custom_call.1} parent=1 // pred_region
      _
    $region21: #{tpu_custom_call.1} parent=1 // pred_fallthru
      _
    // Predicated region
    $region22: #{tpu_custom_call.1} parent=1 // pred_check
      _
    $region23: #{tpu_custom_call.1} parent=1 // pred_check_branch
      %27 = sbr.rel (0) target = $region25
    $region24: #{tpu_custom_call.1} parent=1 // pred_region
      _
    $region25: #{tpu_custom_call.1} parent=1 // pred_fallthru
      _
    // Predicated region
    $region26: #{tpu_custom_call.1} parent=1 // pred_check
      _
    $region27: #{tpu_custom_call.1} parent=1 // pred_check_branch
      %29 = sbr.rel (0) target = $region29
    $region28: #{tpu_custom_call.1} parent=1 // pred_region
      _
    $region29: #{tpu_custom_call.1} parent=1 // pred_fallthru
      _
    // Predicated region
    $region30: #{tpu_custom_call.1} parent=1 // pred_check
      _
    $region31: #{tpu_custom_call.1} parent=1 // pred_check_branch
      %31 = sbr.rel (0) target = $region33
    $region32: #{tpu_custom_call.1} parent=1 // pred_region
      _
    $region33: #{tpu_custom_call.1} parent=1 // pred_fallthru
      _
    // Predicated region
    $region34: #{tpu_custom_call.1} parent=1 // pred_check
      _
    $region35: #{tpu_custom_call.1} parent=1 // pred_check_branch
      %33 = sbr.rel (0) target = $region37
    $region36: #{tpu_custom_call.1} parent=1 // pred_region
      _
    $region37: #{tpu_custom_call.1} parent=1 // pred_fallthru
      _
    // Predicated region
    $region38: #{tpu_custom_call.1} parent=1 // pred_check
      _
    $region39: #{tpu_custom_call.1} parent=1 // pred_check_branch
      %35 = sbr.rel (0) target = $region41
    $region40: #{tpu_custom_call.1} parent=1 // pred_region
      _
    $region41: #{tpu_custom_call.1} parent=1 // pred_fallthru
      _
    %v37 = vld [vmem:[%s0] sm:$0xff]
    %v38 = vlaneseq
    %v39 = vand.u32 %v38, 127
    %40 = vset.pattern.permute.xlu0 0
    %41 = vperm.xlu0 %40, %v37
    %v42 = vpop.permute.xlu0 %41
    %vm43 = vcmp.eq.s32.totalorder %v39, %v42
    %v44 = vsel %vm43, 1, 0
    %v45 = vcvt.s32.f32 %v44
    %46 = vset.pattern.permute.xlu0 1
    %47 = vperm.xlu0 %46, %v37
    %v48 = vpop.permute.xlu0 %47
    %vm49 = vcmp.eq.s32.totalorder %v39, %v48
    %v50 = vsel %vm49, 1, 0
    %v51 = vcvt.s32.f32 %v50
    %v52 = vld [vmem:[%s1] sm:$0xff]
    %v53 = vld [vmem:[%s1 + $0x8] sm:$0xff]
    %v54 = vld [vmem:[%s1 + $0x10] sm:$0xff]
    %v55 = vld [vmem:[%s1 + $0x18] sm:$0xff]
    %vm56 = vcmask 261120
    %v58 = vsel %vm56, %v45, 0
    %60 = vmatpush.msra.mxu0 0.0
    %61 = vmatpush.msra.mxu0 0.0
    %62 = vmatpush.msra.mxu0 0.0
    %63 = vmatpush.msra.mxu0 0.0
    %64 = vmatpush.msra.mxu0 0.0
    %65 = vmatpush.msra.mxu0 0.0
    %66 = vmatpush.msra.mxu0 0.0
    %67 = vmatpush.msra.mxu0 0.0
    %68 = vmatpush.msra.mxu0 0.0
    %69 = vmatpush.msra.mxu0 0.0
    %70 = vmatpush.msra.mxu0 0.0
    %71 = vmatpush.msra.mxu0 0.0
    %72 = vmatpush.msra.mxu0 %v55
    %73 = vmatpush.msra.mxu0 %v54
    %74 = vmatpush.msra.mxu0 %v53
    %75 = vmatpush.msra.mxu0 %v52
    %76 = vmatmul.f32.gmra.mxu0 %v58
    %v77 = vpop.f32.mrf.mxu0
    %v78 = vadd.f32 0.0, %v77
    %79 = vdwg.mxu0
    %v80 = vld [vmem:[%s2] sm:$0xff]
    %v81 = vld [vmem:[%s2 + $0x8] sm:$0xff]
    %v82 = vld [vmem:[%s2 + $0x10] sm:$0xff]
    %v83 = vld [vmem:[%s2 + $0x18] sm:$0xff]
    %v84 = vld [vmem:[%s2 + $0x20] sm:$0xff]
    %v85 = vld [vmem:[%s2 + $0x28] sm:$0xff]
    %vm86 = vcmask 392192
    %v88 = vsel %vm86, %v51, 0
    %90 = vmatpush.msra.mxu0 0.0
    %91 = vmatpush.msra.mxu0 0.0
    %92 = vmatpush.msra.mxu0 0.0
    %93 = vmatpush.msra.mxu0 0.0
    %94 = vmatpush.msra.mxu0 0.0
    %95 = vmatpush.msra.mxu0 0.0
    %96 = vmatpush.msra.mxu0 0.0
    %97 = vmatpush.msra.mxu0 0.0
    %98 = vmatpush.msra.mxu0 0.0
    %99 = vmatpush.msra.mxu0 0.0
    %100 = vmatpush.msra.mxu0 %v85
    %101 = vmatpush.msra.mxu0 %v84
    %102 = vmatpush.msra.mxu0 %v83
    %103 = vmatpush.msra.mxu0 %v82
    %104 = vmatpush.msra.mxu0 %v81
    %105 = vmatpush.msra.mxu0 %v80
    %106 = vmatmul.f32.gmra.mxu0 %v88
    %v107 = vpop.f32.mrf.mxu0
    %v108 = vadd.f32 0.0, %v107
    %109 = vdwg.mxu0
    %v110 = vld [vmem:[%s5] sm:$0xf]
    %v111 = vpack.c.bf16 %v45, %v45
    %v112 = vpack.c.bf16 %v51, %v51
    %v113 = vld [vmem:[%s3] sm:$0xf]
    %v114 = vld [vmem:[%s3 + $0x4] sm:$0xf]
    %v115 = vld [vmem:[%s3 + $0x8] sm:$0xf]
    %v116 = vld [vmem:[%s3 + $0xc] sm:$0xf]
    %v117 = vld [vmem:[%s4] sm:$0xf]
    %v118 = vld [vmem:[%s4 + $0x4] sm:$0xf]
    %v119 = vld [vmem:[%s4 + $0x8] sm:$0xf]
    %v120 = vld [vmem:[%s4 + $0xc] sm:$0xf]
    %v121 = vld [vmem:[%s4 + $0x10] sm:$0xf]
    %v122 = vld [vmem:[%s4 + $0x14] sm:$0xf]
    %v129 = vunpack.c.l.b16 %v117
    %v130 = vunpack.c.l.b16 %v118
    %v131 = vunpack.c.l.b16 %v119
    %v132 = vunpack.c.l.b16 %v120
    %v133 = vunpack.c.l.b16 %v121
    %v134 = vunpack.c.l.b16 %v122
    %v135 = vpack.c.b16 %v130, %v129
    %v136 = vpack.c.b16 %v132, %v131
    %v137 = vpack.c.b16 %v134, %v133
    %v142 = vsel %vm86, %v112, 0
    %144 = vmatpush.bf16.msra.mxu0 0
    %145 = vmatpush.bf16.msra.mxu0 0
    %146 = vmatpush.bf16.msra.mxu0 0
    %147 = vmatpush.bf16.msra.mxu0 0
    %148 = vmatpush.bf16.msra.mxu0 0
    %149 = vmatpush.bf16.msra.mxu0 %v137
    %150 = vmatpush.bf16.msra.mxu0 %v136
    %151 = vmatpush.bf16.msra.mxu0 %v135
    %152 = vmatmul.bf16.gmra.mxu0 %v142
    %v153 = vpop.f32.mrf.mxu0
    %v154 = vadd.f32 0.0, %v153
    %v155 = vpop.f32.mrf.mxu0
    %156 = vdwg.mxu0
    %v161 = vunpack.c.l.b16 %v113
    %v162 = vunpack.c.l.b16 %v114
    %v163 = vunpack.c.l.b16 %v115
    %v164 = vunpack.c.l.b16 %v116
    %v165 = vpack.c.b16 %v162, %v161
    %v166 = vpack.c.b16 %v164, %v163
    %v170 = vsel %vm56, %v111, 0
    %172 = vmatpush.bf16.msra.mxu0 0
    %173 = vmatpush.bf16.msra.mxu0 0
    %174 = vmatpush.bf16.msra.mxu0 0
    %175 = vmatpush.bf16.msra.mxu0 0
    %176 = vmatpush.bf16.msra.mxu0 0
    %177 = vmatpush.bf16.msra.mxu0 0
    %178 = vmatpush.bf16.msra.mxu0 %v166
    %179 = vmatpush.bf16.msra.mxu0 %v165
    %180 = vmatmul.bf16.gmra.mxu0 %v170
    %v181 = vpop.f32.mrf.mxu0
    %v182 = vadd.f32 %v154, %v181
    %v183 = vpop.f32.mrf.mxu0
    %184 = vdwg.mxu0
    %v185 = vperm.slane %v110, 0
    %v186 = vadd.f32 %v182, %v185
    %v187 = vmax.f32 %v186, 0.0
    %v188 = vpack.c.bf16 %v187, %v187
    %v189 = vld [vmem:[%s6] sm:$0xf]
    %v190 = vld [vmem:[%s6 + $0x4] sm:$0xf]
    %v191 = vld [vmem:[%s6 + $0x8] sm:$0xf]
    %v192 = vld [vmem:[%s6 + $0xc] sm:$0xf]
    %v193 = vperm.slane %v110, 1
    %v198 = vunpack.c.l.b16 %v189
    %v199 = vunpack.c.l.b16 %v190
    %v200 = vunpack.c.l.b16 %v191
    %v201 = vunpack.c.l.b16 %v192
    %v202 = vpack.c.b16 %v199, %v198
    %v203 = vpack.c.b16 %v201, %v200
    %v207 = vsel %vm56, %v188, 0
    %209 = vmatpush.bf16.msra.mxu0 0
    %210 = vmatpush.bf16.msra.mxu0 0
    %211 = vmatpush.bf16.msra.mxu0 0
    %212 = vmatpush.bf16.msra.mxu0 0
    %213 = vmatpush.bf16.msra.mxu0 0
    %214 = vmatpush.bf16.msra.mxu0 0
    %215 = vmatpush.bf16.msra.mxu0 %v203
    %216 = vmatpush.bf16.msra.mxu0 %v202
    %217 = vmatmul.bf16.gmra.mxu0 %v207
    %v218 = vpop.f32.mrf.mxu0
    %v219 = vadd.f32 %v193, %v218
    %v220 = vpop.f32.mrf.mxu0
    %221 = vdwg.mxu0
    %v222 = vmax.f32 %v219, 0.0
    %v223 = vpack.c.bf16 %v222, %v222
    %v224 = vld [vmem:[%s7] sm:$0xf]
    %v225 = vld [vmem:[%s7 + $0x4] sm:$0xf]
    %v226 = vperm.slane %v110, 2
    %v229 = vunpack.c.l.b16 %v224
    %v230 = vunpack.c.l.b16 %v225
    %v231 = vpack.c.b16 %v230, %v229
    %vm233 = vcmask 130048
    %v235 = vsel %vm233, %v223, 0
    %237 = vmatpush.bf16.msra.mxu0 0
    %238 = vmatpush.bf16.msra.mxu0 0
    %239 = vmatpush.bf16.msra.mxu0 0
    %240 = vmatpush.bf16.msra.mxu0 0
    %241 = vmatpush.bf16.msra.mxu0 0
    %242 = vmatpush.bf16.msra.mxu0 0
    %243 = vmatpush.bf16.msra.mxu0 0
    %244 = vmatpush.bf16.msra.mxu0 %v231
    %245 = vmatmul.bf16.gmra.mxu0 %v235
    %v246 = vpop.f32.mrf.mxu0
    %v247 = vadd.f32 %v226, %v246
    %v248 = vpop.f32.mrf.mxu0
    %249 = vdwg.mxu0
    %v250 = vmax.f32 %v247, 0.0
    %v251 = vpack.c.bf16 %v250, %v250
    %v252 = vld [vmem:[%s8] sm:$0xf]
    %v253 = vperm.slane %v110, 3
    %vm254 = vcmask 64512
    %v256 = vsel %vm254, %v251, 0
    %vm258 = vcmask 1043456
    %v260 = vsel %vm258, %v252, 0
    %262 = vmatpush.bf16.msra.mxu0 0
    %263 = vmatpush.bf16.msra.mxu0 0
    %264 = vmatpush.bf16.msra.mxu0 0
    %265 = vmatpush.bf16.msra.mxu0 0
    %266 = vmatpush.bf16.msra.mxu0 0
    %267 = vmatpush.bf16.msra.mxu0 0
    %268 = vmatpush.bf16.msra.mxu0 0
    %269 = vmatpush.bf16.msra.mxu0 %v260
    %270 = vmatmul.bf16.gmra.mxu0 %v256
    %v271 = vpop.f32.mrf.mxu0
    %v272 = vadd.f32 %v253, %v271
    %v273 = vpop.f32.mrf.mxu0
    %274 = vdwg.mxu0
    %v275 = vmax.f32 %v272, 0.0
    %v276 = vpack.c.bf16 %v275, %v275
    %v277 = vld [vmem:[%s9] sm:$0x3]
    %vm278 = vcmask 31744
    %v280 = vsel %vm278, %v276, 0
    %vm282 = vcmask 1041408
    %v284 = vsel %vm282, %v277, 0
    %286 = vmatpush.bf16.msra.mxu0 0
    %287 = vmatpush.bf16.msra.mxu0 0
    %288 = vmatpush.bf16.msra.mxu0 0
    %289 = vmatpush.bf16.msra.mxu0 0
    %290 = vmatpush.bf16.msra.mxu0 0
    %291 = vmatpush.bf16.msra.mxu0 0
    %292 = vmatpush.bf16.msra.mxu0 0
    %293 = vmatpush.bf16.msra.mxu0 %v284
    %294 = vmatmul.bf16.gmra.mxu0 %v280
    %v295 = vpop.f32.mrf.mxu0
    %v296 = vadd.f32 0.0, %v295
    %v297 = vpop.f32.mrf.mxu0
    %298 = vdwg.mxu0
    %300 = vrot.lane.b32.xlu0 %v78, 1
    %v301 = vpop.permute.xlu0 %300
    %304 = vrot.lane.b32.xlu0 %v108, 33
    %v305 = vpop.permute.xlu0 %304
    %vm307 = vcmask 7168
    %v308 = vsel %vm307, %v296, %v301
    %vm309 = vcmask 269312
    %v310 = vsel %vm309, %v308, %v305
    %vm311 = vcmask 531456
    %v312 = vsel %vm311, %v310, 0.0
    %313 = vst [vmem:[#allocation2] sm:$0xff] %v312
    // Predicated region
    $region42: #{tpu_custom_call.1} parent=1 // pred_check
      _
    $region43: #{tpu_custom_call.1} parent=1 // pred_check_branch
      %315 = sbr.rel (0) target = $region45
    $region44: #{tpu_custom_call.1} parent=1 // pred_region
      %317 = vsyncadd [#allocation3], 0
      %s319 = sshll.u32 [#allocation2], 4
      %s320 = int_to_ptr.vmem [resolvable:$true] %s319
      %s321 = sshll.u32 %s10, 4
      %s322 = int_to_ptr.hbm [resolvable:$true] %s321
      %324 = dma.vmem_to_hbm [thread:$0]  %s320, 128, %s322, [#allocation3]
    $region45: #{tpu_custom_call.1} parent=1 // pred_fallthru
      _
    // Predicated region
    $region46: #{tpu_custom_call.1} parent=1 // pred_check
      _
    $region47: #{tpu_custom_call.1} parent=1 // pred_check_branch
      %326 = sbr.rel (0) target = $region49
    $region48: #{tpu_custom_call.1} parent=1 // pred_region
      %328 = dma.done [#allocation3], 128
    $region49: #{tpu_custom_call.1} parent=1 // pred_fallthru
      _
    %329 = vsyncpa [#allocation3], 1

</llo_original>
